<compile_context>
chip_gen: v7x
topology: tpu7x:2x2x1
jax: 0.10.0
libtpu: 0.0.40
codegen_flags: <defaults>
</compile_context>

<pallas_src>
import functools

import numpy as np
import jax
import jax.numpy as jnp
from jax.experimental import pallas as pl
from jax.experimental.pallas import tpu as pltpu


def create_gaussian_kernel_1d(cutoff_frequency: int) -> np.ndarray:
    """1D Gaussian (k,) with k = 4*cutoff+1, sigma = cutoff, sum == 1."""
    k = int(cutoff_frequency) * 4 + 1
    sigma = float(cutoff_frequency)
    mean = k // 2
    ax = np.arange(k, dtype=np.float64)
    g1 = np.exp(-0.5 * ((ax - mean) / sigma) ** 2)
    g1 /= g1.sum()
    return g1


def create_gaussian_kernel(cutoff_frequency: int) -> np.ndarray:
    """2D Gaussian kernel (k, k) = outer(g1, g1), normalized (matches part1)."""
    g1 = create_gaussian_kernel_1d(cutoff_frequency)
    g2 = np.outer(g1, g1)
    g2 /= g2.sum()
    return g2.astype(np.float32)


def _tree_sum(parts):
    parts = [q for q in parts if q is not None]
    while len(parts) > 1:
        nxt = []
        for i in range(0, len(parts), 2):
            nxt.append(parts[i] + parts[i + 1] if i + 1 < len(parts) else parts[i])
        parts = nxt
    return parts[0]


def _hybrid_kernel(x1p_ref, x2p_ref, low_ref, high_ref, hyb_ref, *, taps, p, m, n):
    """One group of zero-padded channel planes per grid step.

    x1p_ref / x2p_ref: (G, m+2p, n+2p) padded planes of image1 / image2.
    outputs:           (G, m, n) low_frequencies, high_frequencies, hybrid.
    """
    k = len(taps)

    def conv_w(xp):
        # 1-D Gaussian along W (lane axis): (G, m+2p, n+2p) -> (G, m+2p, n).
        parts = [None] * 4                      # partial sums -> VALU co-issue
        for j in range(k):
            t = taps[j] * xp[:, :, j:j + n]
            parts[j & 3] = t if parts[j & 3] is None else parts[j & 3] + t
        return _tree_sum(parts)

    def conv_h(xr):
        # 1-D Gaussian along H (sublane axis): (G, m+2p, n) -> (G, m, n).
        parts = [None] * 4
        for i in range(k):
            t = taps[i] * xr[:, i:i + m, :]
            parts[i & 3] = t if parts[i & 3] is None else parts[i & 3] + t
        return _tree_sum(parts)

    def low_pass(xp):
        return conv_h(conv_w(xp))

    x1p = x1p_ref[...].astype(jnp.float32)
    x2p = x2p_ref[...].astype(jnp.float32)

    low1 = low_pass(x1p)                        # low frequencies of image1
    low2 = low_pass(x2p)
    x2 = x2p[:, p:p + m, p:p + n]               # interior == unpadded image2
    high = x2 - low2                            # high frequencies of image2

    low_ref[...] = low1
    high_ref[...] = high
    hyb_ref[...] = jnp.clip(low1 + high, 0.0, 1.0)


_VMEM_LIMIT_BYTES = 48 * 1024 * 1024    # scoped VMEM limit, safe on v5e/v6e/v7x
_VMEM_BUDGET_BYTES = 36 * 1024 * 1024   # working-set target (headroom under limit)


def _choose_group_size(bc, mp, np_, m, n):
    """Largest divisor G of bc whose double-buffered working set fits the VMEM
    budget, preferring >= ~4 grid steps so parallel/megacore sharding has work."""
    per_plane = 4 * (2 * mp * np_ + 3 * m * n)    # f32: 2 padded inputs + 3 outputs
    resident_per_plane = 2 * per_plane            # pipeline double-buffering
    max_g = max(1, _VMEM_BUDGET_BYTES // resident_per_plane)
    target = int(max(1, min(max_g, pl.cdiv(bc, 4))))
    g = 1
    for d in range(1, min(target, bc) + 1):
        if bc % d == 0:
            g = d
    return g


def hybrid_image_forward(image1, image2, cutoff_frequency: int):
    """JAX/Pallas equivalent of HybridImageModel.forward.

    image1, image2: (B, C, H, W) arrays in [0, 1]
    cutoff_frequency: static Python int (kernel size is shape-determining)
    Returns (low_frequencies, high_frequencies, hybrid_image), each (B,C,H,W) f32.
    """
    b, c, m, n = image1.shape
    g1 = create_gaussian_kernel_1d(cutoff_frequency)
    k = g1.shape[0]
    p = k // 2
    taps = tuple(float(v) for v in g1)            # baked compile-time constants

    bc = b * c
    x1 = image1.reshape(bc, m, n).astype(jnp.float32)
    x2 = image2.reshape(bc, m, n).astype(jnp.float32)
    # TODO(synk): for very large images, pad inside the kernel (zero-filled VMEM
    # scratch) instead of this extra HBM pass, and add H-halo tiling (manual
    # DMA) when a whole padded plane group no longer fits the VMEM budget.
    x1p = jnp.pad(x1, ((0, 0), (p, p), (p, p)))   # zero pad = conv2d padding
    x2p = jnp.pad(x2, ((0, 0), (p, p), (p, p)))
    mp, np_ = m + 2 * p, n + 2 * p

    grp = _choose_group_size(bc, mp, np_, m, n)
    grid = (bc // grp,)

    kernel = functools.partial(_hybrid_kernel, taps=taps, p=p, m=m, n=n)
    out_sd = jax.ShapeDtypeStruct((bc, m, n), jnp.float32)

    low, high, hyb = pl.pallas_call(
        kernel,
        out_shape=(out_sd, out_sd, out_sd),
        grid_spec=pltpu.PrefetchScalarGridSpec(
            num_scalar_prefetch=0,
            grid=grid,
            in_specs=[
                pl.BlockSpec((grp, mp, np_), lambda i: (i, 0, 0)),
                pl.BlockSpec((grp, mp, np_), lambda i: (i, 0, 0)),
            ],
            out_specs=[
                pl.BlockSpec((grp, m, n), lambda i: (i, 0, 0)),
                pl.BlockSpec((grp, m, n), lambda i: (i, 0, 0)),
                pl.BlockSpec((grp, m, n), lambda i: (i, 0, 0)),
            ],
        ),
        compiler_params=pltpu.CompilerParams(
            dimension_semantics=("parallel",),
            vmem_limit_bytes=_VMEM_LIMIT_BYTES),
    )(x1p, x2p)

    return (low.reshape(b, c, m, n),
            high.reshape(b, c, m, n),
            hyb.reshape(b, c, m, n))


def _reference(image1, image2, cutoff_frequency: int):
    """Pure-JAX reference matching F.conv2d(groups=C) semantics."""
    gk = jnp.asarray(create_gaussian_kernel(cutoff_frequency))
    b, c, m, n = image1.shape
    k = gk.shape[0]
    w = jnp.tile(gk[None, None], (c, 1, 1, 1))    # (C, 1, k, k) depthwise weights

    def dconv(x):
        return jax.lax.conv_general_dilated(
            x.astype(jnp.float32), w, window_strides=(1, 1),
            padding=((k // 2, k // 2), (k // 2, k // 2)),
            feature_group_count=c,
            dimension_numbers=("NCHW", "OIHW", "NCHW"))

    low1 = dconv(image1)
    low2 = dconv(image2)
    high2 = image2.astype(jnp.float32) - low2
    return low1, high2, jnp.clip(low1 + high2, 0.0, 1.0)


if __name__ == "__main__":
    key = jax.random.PRNGKey(0)
    k1, k2 = jax.random.split(key)
    B, C, H, W = 2, 3, 16, 16            # C=3 matches the module's np.tile(..., (3,1,1,1))
    cutoff = 2                           # kernel size k = 9, padding = 4
    image1 = jax.random.uniform(k1, (B, C, H, W), dtype=jnp.float32)
    image2 = jax.random.uniform(k2, (B, C, H, W), dtype=jnp.float32)

    low, high, hyb = hybrid_image_forward(image1, image2, cutoff)
    jax.block_until_ready((low, high, hyb))

    low_r, high_r, hyb_r = _reference(image1, image2, cutoff)
    assert low.shape == (B, C, H, W) and high.shape == (B, C, H, W) and hyb.shape == (B, C, H, W)
    np.testing.assert_allclose(np.asarray(low), np.asarray(low_r), rtol=1e-5, atol=1e-5)
    np.testing.assert_allclose(np.asarray(high), np.asarray(high_r), rtol=1e-5, atol=1e-5)
    np.testing.assert_allclose(np.asarray(hyb), np.asarray(hyb_r), rtol=1e-5, atol=1e-5)

    print("KERNEL_OK")
</pallas_src>

<mosaic_0001>
module attributes {stable_mosaic.version = 11 : i64} {
  func.func @_hybrid_kernel(%arg0: i32, %arg1: memref<2x24x24xf32, #tpu.memory_space<vmem>>, %arg2: memref<2x24x24xf32, #tpu.memory_space<vmem>>, %arg3: memref<2x16x16xf32, #tpu.memory_space<vmem>>, %arg4: memref<2x16x16xf32, #tpu.memory_space<vmem>>, %arg5: memref<2x16x16xf32, #tpu.memory_space<vmem>>) attributes {dimension_semantics = [#tpu.dimension_semantics<parallel>], iteration_bounds = array<i64: 3>, scalar_prefetch = 0 : i64, scratch_operands = 0 : i64, tpu.core_type = #tpu.core_type<tc>, window_params = [{transform_indices = @transform_0, window_bounds = array<i64: 2, 24, 24>}, {transform_indices = @transform_1, window_bounds = array<i64: 2, 24, 24>}, {transform_indices = @transform_2, window_bounds = array<i64: 2, 16, 16>}, {transform_indices = @transform_3, window_bounds = array<i64: 2, 16, 16>}, {transform_indices = @transform_4, window_bounds = array<i64: 2, 16, 16>}]} {
    %c0 = arith.constant 0 : index
    %c0_0 = arith.constant 0 : index
    %c0_1 = arith.constant 0 : index
    %0 = vector.load %arg1[%c0, %c0_0, %c0_1] : memref<2x24x24xf32, #tpu.memory_space<vmem>>, vector<2x24x24xf32>
    %c0_2 = arith.constant 0 : index
    %c0_3 = arith.constant 0 : index
    %c0_4 = arith.constant 0 : index
    %1 = vector.load %arg2[%c0_2, %c0_3, %c0_4] : memref<2x24x24xf32, #tpu.memory_space<vmem>>, vector<2x24x24xf32>
    %2 = vector.extract_strided_slice %0 {offsets = [0, 0, 0], sizes = [2, 24, 16], strides = [1, 1, 1]} : vector<2x24x24xf32> to vector<2x24x16xf32>
    %cst = arith.constant 0.0276305508 : f32
    %3 = vector.broadcast %cst : f32 to vector<2x24x16xf32>
    %4 = arith.mulf %3, %2 : vector<2x24x16xf32>
    %5 = vector.extract_strided_slice %0 {offsets = [0, 0, 1], sizes = [2, 24, 16], strides = [1, 1, 1]} : vector<2x24x24xf32> to vector<2x24x16xf32>
    %cst_5 = arith.constant 0.0662822425 : f32
    %6 = vector.broadcast %cst_5 : f32 to vector<2x24x16xf32>
    %7 = arith.mulf %6, %5 : vector<2x24x16xf32>
    %8 = vector.extract_strided_slice %0 {offsets = [0, 0, 2], sizes = [2, 24, 16], strides = [1, 1, 1]} : vector<2x24x24xf32> to vector<2x24x16xf32>
    %cst_6 = arith.constant 0.12383154 : f32
    %9 = vector.broadcast %cst_6 : f32 to vector<2x24x16xf32>
    %10 = arith.mulf %9, %8 : vector<2x24x16xf32>
    %11 = vector.extract_strided_slice %0 {offsets = [0, 0, 3], sizes = [2, 24, 16], strides = [1, 1, 1]} : vector<2x24x24xf32> to vector<2x24x16xf32>
    %cst_7 = arith.constant 0.180173829 : f32
    %12 = vector.broadcast %cst_7 : f32 to vector<2x24x16xf32>
    %13 = arith.mulf %12, %11 : vector<2x24x16xf32>
    %14 = vector.extract_strided_slice %0 {offsets = [0, 0, 4], sizes = [2, 24, 16], strides = [1, 1, 1]} : vector<2x24x24xf32> to vector<2x24x16xf32>
    %cst_8 = arith.constant 0.204163685 : f32
    %15 = vector.broadcast %cst_8 : f32 to vector<2x24x16xf32>
    %16 = arith.mulf %15, %14 : vector<2x24x16xf32>
    %17 = arith.addf %4, %16 : vector<2x24x16xf32>
    %18 = vector.extract_strided_slice %0 {offsets = [0, 0, 5], sizes = [2, 24, 16], strides = [1, 1, 1]} : vector<2x24x24xf32> to vector<2x24x16xf32>
    %cst_9 = arith.constant 0.180173829 : f32
    %19 = vector.broadcast %cst_9 : f32 to vector<2x24x16xf32>
    %20 = arith.mulf %19, %18 : vector<2x24x16xf32>
    %21 = arith.addf %7, %20 : vector<2x24x16xf32>
    %22 = vector.extract_strided_slice %0 {offsets = [0, 0, 6], sizes = [2, 24, 16], strides = [1, 1, 1]} : vector<2x24x24xf32> to vector<2x24x16xf32>
    %cst_10 = arith.constant 0.12383154 : f32
    %23 = vector.broadcast %cst_10 : f32 to vector<2x24x16xf32>
    %24 = arith.mulf %23, %22 : vector<2x24x16xf32>
    %25 = arith.addf %10, %24 : vector<2x24x16xf32>
    %26 = vector.extract_strided_slice %0 {offsets = [0, 0, 7], sizes = [2, 24, 16], strides = [1, 1, 1]} : vector<2x24x24xf32> to vector<2x24x16xf32>
    %cst_11 = arith.constant 0.0662822425 : f32
    %27 = vector.broadcast %cst_11 : f32 to vector<2x24x16xf32>
    %28 = arith.mulf %27, %26 : vector<2x24x16xf32>
    %29 = arith.addf %13, %28 : vector<2x24x16xf32>
    %30 = vector.extract_strided_slice %0 {offsets = [0, 0, 8], sizes = [2, 24, 16], strides = [1, 1, 1]} : vector<2x24x24xf32> to vector<2x24x16xf32>
    %cst_12 = arith.constant 0.0276305508 : f32
    %31 = vector.broadcast %cst_12 : f32 to vector<2x24x16xf32>
    %32 = arith.mulf %31, %30 : vector<2x24x16xf32>
    %33 = arith.addf %17, %32 : vector<2x24x16xf32>
    %34 = arith.addf %33, %21 : vector<2x24x16xf32>
    %35 = arith.addf %25, %29 : vector<2x24x16xf32>
    %36 = arith.addf %34, %35 : vector<2x24x16xf32>
    %37 = vector.extract_strided_slice %36 {offsets = [0, 0, 0], sizes = [2, 16, 16], strides = [1, 1, 1]} : vector<2x24x16xf32> to vector<2x16x16xf32>
    %cst_13 = arith.constant 0.0276305508 : f32
    %38 = vector.broadcast %cst_13 : f32 to vector<2x16x16xf32>
    %39 = arith.mulf %38, %37 : vector<2x16x16xf32>
    %40 = vector.extract_strided_slice %36 {offsets = [0, 1, 0], sizes = [2, 16, 16], strides = [1, 1, 1]} : vector<2x24x16xf32> to vector<2x16x16xf32>
    %cst_14 = arith.constant 0.0662822425 : f32
    %41 = vector.broadcast %cst_14 : f32 to vector<2x16x16xf32>
    %42 = arith.mulf %41, %40 : vector<2x16x16xf32>
    %43 = vector.extract_strided_slice %36 {offsets = [0, 2, 0], sizes = [2, 16, 16], strides = [1, 1, 1]} : vector<2x24x16xf32> to vector<2x16x16xf32>
    %cst_15 = arith.constant 0.12383154 : f32
    %44 = vector.broadcast %cst_15 : f32 to vector<2x16x16xf32>
    %45 = arith.mulf %44, %43 : vector<2x16x16xf32>
    %46 = vector.extract_strided_slice %36 {offsets = [0, 3, 0], sizes = [2, 16, 16], strides = [1, 1, 1]} : vector<2x24x16xf32> to vector<2x16x16xf32>
    %cst_16 = arith.constant 0.180173829 : f32
    %47 = vector.broadcast %cst_16 : f32 to vector<2x16x16xf32>
    %48 = arith.mulf %47, %46 : vector<2x16x16xf32>
    %49 = vector.extract_strided_slice %36 {offsets = [0, 4, 0], sizes = [2, 16, 16], strides = [1, 1, 1]} : vector<2x24x16xf32> to vector<2x16x16xf32>
    %cst_17 = arith.constant 0.204163685 : f32
    %50 = vector.broadcast %cst_17 : f32 to vector<2x16x16xf32>
    %51 = arith.mulf %50, %49 : vector<2x16x16xf32>
    %52 = arith.addf %39, %51 : vector<2x16x16xf32>
    %53 = vector.extract_strided_slice %36 {offsets = [0, 5, 0], sizes = [2, 16, 16], strides = [1, 1, 1]} : vector<2x24x16xf32> to vector<2x16x16xf32>
    %cst_18 = arith.constant 0.180173829 : f32
    %54 = vector.broadcast %cst_18 : f32 to vector<2x16x16xf32>
    %55 = arith.mulf %54, %53 : vector<2x16x16xf32>
    %56 = arith.addf %42, %55 : vector<2x16x16xf32>
    %57 = vector.extract_strided_slice %36 {offsets = [0, 6, 0], sizes = [2, 16, 16], strides = [1, 1, 1]} : vector<2x24x16xf32> to vector<2x16x16xf32>
    %cst_19 = arith.constant 0.12383154 : f32
    %58 = vector.broadcast %cst_19 : f32 to vector<2x16x16xf32>
    %59 = arith.mulf %58, %57 : vector<2x16x16xf32>
    %60 = arith.addf %45, %59 : vector<2x16x16xf32>
    %61 = vector.extract_strided_slice %36 {offsets = [0, 7, 0], sizes = [2, 16, 16], strides = [1, 1, 1]} : vector<2x24x16xf32> to vector<2x16x16xf32>
    %cst_20 = arith.constant 0.0662822425 : f32
    %62 = vector.broadcast %cst_20 : f32 to vector<2x16x16xf32>
    %63 = arith.mulf %62, %61 : vector<2x16x16xf32>
    %64 = arith.addf %48, %63 : vector<2x16x16xf32>
    %65 = vector.extract_strided_slice %36 {offsets = [0, 8, 0], sizes = [2, 16, 16], strides = [1, 1, 1]} : vector<2x24x16xf32> to vector<2x16x16xf32>
    %cst_21 = arith.constant 0.0276305508 : f32
    %66 = vector.broadcast %cst_21 : f32 to vector<2x16x16xf32>
    %67 = arith.mulf %66, %65 : vector<2x16x16xf32>
    %68 = arith.addf %52, %67 : vector<2x16x16xf32>
    %69 = arith.addf %68, %56 : vector<2x16x16xf32>
    %70 = arith.addf %60, %64 : vector<2x16x16xf32>
    %71 = arith.addf %69, %70 : vector<2x16x16xf32>
    %72 = vector.extract_strided_slice %1 {offsets = [0, 0, 0], sizes = [2, 24, 16], strides = [1, 1, 1]} : vector<2x24x24xf32> to vector<2x24x16xf32>
    %cst_22 = arith.constant 0.0276305508 : f32
    %73 = vector.broadcast %cst_22 : f32 to vector<2x24x16xf32>
    %74 = arith.mulf %73, %72 : vector<2x24x16xf32>
    %75 = vector.extract_strided_slice %1 {offsets = [0, 0, 1], sizes = [2, 24, 16], strides = [1, 1, 1]} : vector<2x24x24xf32> to vector<2x24x16xf32>
    %cst_23 = arith.constant 0.0662822425 : f32
    %76 = vector.broadcast %cst_23 : f32 to vector<2x24x16xf32>
    %77 = arith.mulf %76, %75 : vector<2x24x16xf32>
    %78 = vector.extract_strided_slice %1 {offsets = [0, 0, 2], sizes = [2, 24, 16], strides = [1, 1, 1]} : vector<2x24x24xf32> to vector<2x24x16xf32>
    %cst_24 = arith.constant 0.12383154 : f32
    %79 = vector.broadcast %cst_24 : f32 to vector<2x24x16xf32>
    %80 = arith.mulf %79, %78 : vector<2x24x16xf32>
    %81 = vector.extract_strided_slice %1 {offsets = [0, 0, 3], sizes = [2, 24, 16], strides = [1, 1, 1]} : vector<2x24x24xf32> to vector<2x24x16xf32>
    %cst_25 = arith.constant 0.180173829 : f32
    %82 = vector.broadcast %cst_25 : f32 to vector<2x24x16xf32>
    %83 = arith.mulf %82, %81 : vector<2x24x16xf32>
    %84 = vector.extract_strided_slice %1 {offsets = [0, 0, 4], sizes = [2, 24, 16], strides = [1, 1, 1]} : vector<2x24x24xf32> to vector<2x24x16xf32>
    %cst_26 = arith.constant 0.204163685 : f32
    %85 = vector.broadcast %cst_26 : f32 to vector<2x24x16xf32>
    %86 = arith.mulf %85, %84 : vector<2x24x16xf32>
    %87 = arith.addf %74, %86 : vector<2x24x16xf32>
    %88 = vector.extract_strided_slice %1 {offsets = [0, 0, 5], sizes = [2, 24, 16], strides = [1, 1, 1]} : vector<2x24x24xf32> to vector<2x24x16xf32>
    %cst_27 = arith.constant 0.180173829 : f32
    %89 = vector.broadcast %cst_27 : f32 to vector<2x24x16xf32>
    %90 = arith.mulf %89, %88 : vector<2x24x16xf32>
    %91 = arith.addf %77, %90 : vector<2x24x16xf32>
    %92 = vector.extract_strided_slice %1 {offsets = [0, 0, 6], sizes = [2, 24, 16], strides = [1, 1, 1]} : vector<2x24x24xf32> to vector<2x24x16xf32>
    %cst_28 = arith.constant 0.12383154 : f32
    %93 = vector.broadcast %cst_28 : f32 to vector<2x24x16xf32>
    %94 = arith.mulf %93, %92 : vector<2x24x16xf32>
    %95 = arith.addf %80, %94 : vector<2x24x16xf32>
    %96 = vector.extract_strided_slice %1 {offsets = [0, 0, 7], sizes = [2, 24, 16], strides = [1, 1, 1]} : vector<2x24x24xf32> to vector<2x24x16xf32>
    %cst_29 = arith.constant 0.0662822425 : f32
    %97 = vector.broadcast %cst_29 : f32 to vector<2x24x16xf32>
    %98 = arith.mulf %97, %96 : vector<2x24x16xf32>
    %99 = arith.addf %83, %98 : vector<2x24x16xf32>
    %100 = vector.extract_strided_slice %1 {offsets = [0, 0, 8], sizes = [2, 24, 16], strides = [1, 1, 1]} : vector<2x24x24xf32> to vector<2x24x16xf32>
    %cst_30 = arith.constant 0.0276305508 : f32
    %101 = vector.broadcast %cst_30 : f32 to vector<2x24x16xf32>
    %102 = arith.mulf %101, %100 : vector<2x24x16xf32>
    %103 = arith.addf %87, %102 : vector<2x24x16xf32>
    %104 = arith.addf %103, %91 : vector<2x24x16xf32>
    %105 = arith.addf %95, %99 : vector<2x24x16xf32>
    %106 = arith.addf %104, %105 : vector<2x24x16xf32>
    %107 = vector.extract_strided_slice %106 {offsets = [0, 0, 0], sizes = [2, 16, 16], strides = [1, 1, 1]} : vector<2x24x16xf32> to vector<2x16x16xf32>
    %cst_31 = arith.constant 0.0276305508 : f32
    %108 = vector.broadcast %cst_31 : f32 to vector<2x16x16xf32>
    %109 = arith.mulf %108, %107 : vector<2x16x16xf32>
    %110 = vector.extract_strided_slice %106 {offsets = [0, 1, 0], sizes = [2, 16, 16], strides = [1, 1, 1]} : vector<2x24x16xf32> to vector<2x16x16xf32>
    %cst_32 = arith.constant 0.0662822425 : f32
    %111 = vector.broadcast %cst_32 : f32 to vector<2x16x16xf32>
    %112 = arith.mulf %111, %110 : vector<2x16x16xf32>
    %113 = vector.extract_strided_slice %106 {offsets = [0, 2, 0], sizes = [2, 16, 16], strides = [1, 1, 1]} : vector<2x24x16xf32> to vector<2x16x16xf32>
    %cst_33 = arith.constant 0.12383154 : f32
    %114 = vector.broadcast %cst_33 : f32 to vector<2x16x16xf32>
    %115 = arith.mulf %114, %113 : vector<2x16x16xf32>
    %116 = vector.extract_strided_slice %106 {offsets = [0, 3, 0], sizes = [2, 16, 16], strides = [1, 1, 1]} : vector<2x24x16xf32> to vector<2x16x16xf32>
    %cst_34 = arith.constant 0.180173829 : f32
    %117 = vector.broadcast %cst_34 : f32 to vector<2x16x16xf32>
    %118 = arith.mulf %117, %116 : vector<2x16x16xf32>
    %119 = vector.extract_strided_slice %106 {offsets = [0, 4, 0], sizes = [2, 16, 16], strides = [1, 1, 1]} : vector<2x24x16xf32> to vector<2x16x16xf32>
    %cst_35 = arith.constant 0.204163685 : f32
    %120 = vector.broadcast %cst_35 : f32 to vector<2x16x16xf32>
    %121 = arith.mulf %120, %119 : vector<2x16x16xf32>
    %122 = arith.addf %109, %121 : vector<2x16x16xf32>
    %123 = vector.extract_strided_slice %106 {offsets = [0, 5, 0], sizes = [2, 16, 16], strides = [1, 1, 1]} : vector<2x24x16xf32> to vector<2x16x16xf32>
    %cst_36 = arith.constant 0.180173829 : f32
    %124 = vector.broadcast %cst_36 : f32 to vector<2x16x16xf32>
    %125 = arith.mulf %124, %123 : vector<2x16x16xf32>
    %126 = arith.addf %112, %125 : vector<2x16x16xf32>
    %127 = vector.extract_strided_slice %106 {offsets = [0, 6, 0], sizes = [2, 16, 16], strides = [1, 1, 1]} : vector<2x24x16xf32> to vector<2x16x16xf32>
    %cst_37 = arith.constant 0.12383154 : f32
    %128 = vector.broadcast %cst_37 : f32 to vector<2x16x16xf32>
    %129 = arith.mulf %128, %127 : vector<2x16x16xf32>
    %130 = arith.addf %115, %129 : vector<2x16x16xf32>
    %131 = vector.extract_strided_slice %106 {offsets = [0, 7, 0], sizes = [2, 16, 16], strides = [1, 1, 1]} : vector<2x24x16xf32> to vector<2x16x16xf32>
    %cst_38 = arith.constant 0.0662822425 : f32
    %132 = vector.broadcast %cst_38 : f32 to vector<2x16x16xf32>
    %133 = arith.mulf %132, %131 : vector<2x16x16xf32>
    %134 = arith.addf %118, %133 : vector<2x16x16xf32>
    %135 = vector.extract_strided_slice %106 {offsets = [0, 8, 0], sizes = [2, 16, 16], strides = [1, 1, 1]} : vector<2x24x16xf32> to vector<2x16x16xf32>
    %cst_39 = arith.constant 0.0276305508 : f32
    %136 = vector.broadcast %cst_39 : f32 to vector<2x16x16xf32>
    %137 = arith.mulf %136, %135 : vector<2x16x16xf32>
    %138 = arith.addf %122, %137 : vector<2x16x16xf32>
    %139 = arith.addf %138, %126 : vector<2x16x16xf32>
    %140 = arith.addf %130, %134 : vector<2x16x16xf32>
    %141 = arith.addf %139, %140 : vector<2x16x16xf32>
    %142 = vector.extract_strided_slice %1 {offsets = [0, 4, 4], sizes = [2, 16, 16], strides = [1, 1, 1]} : vector<2x24x24xf32> to vector<2x16x16xf32>
    %143 = arith.subf %142, %141 : vector<2x16x16xf32>
    %c0_40 = arith.constant 0 : index
    %c0_41 = arith.constant 0 : index
    %c0_42 = arith.constant 0 : index
    %144 = vector.load %arg3[%c0_40, %c0_41, %c0_42] : memref<2x16x16xf32, #tpu.memory_space<vmem>>, vector<2x16x16xf32>
    tpu.vector_store %arg3[%c0_40, %c0_41, %c0_42], %71 {strides = array<i32>} : memref<2x16x16xf32, #tpu.memory_space<vmem>>, vector<2x16x16xf32>,
    %c0_43 = arith.constant 0 : index
    %c0_44 = arith.constant 0 : index
    %c0_45 = arith.constant 0 : index
    %145 = vector.load %arg4[%c0_43, %c0_44, %c0_45] : memref<2x16x16xf32, #tpu.memory_space<vmem>>, vector<2x16x16xf32>
    tpu.vector_store %arg4[%c0_43, %c0_44, %c0_45], %143 {strides = array<i32>} : memref<2x16x16xf32, #tpu.memory_space<vmem>>, vector<2x16x16xf32>,
    %146 = arith.addf %71, %143 : vector<2x16x16xf32>
    %cst_46 = arith.constant 0.000000e+00 : f32
    %cst_47 = arith.constant 1.000000e+00 : f32
    %147 = vector.broadcast %cst_46 : f32 to vector<2x16x16xf32>
    %148 = arith.maximumf %147, %146 : vector<2x16x16xf32>
    %149 = vector.broadcast %cst_47 : f32 to vector<2x16x16xf32>
    %150 = arith.minimumf %149, %148 : vector<2x16x16xf32>
    %c0_48 = arith.constant 0 : index
    %c0_49 = arith.constant 0 : index
    %c0_50 = arith.constant 0 : index
    %151 = vector.load %arg5[%c0_48, %c0_49, %c0_50] : memref<2x16x16xf32, #tpu.memory_space<vmem>>, vector<2x16x16xf32>
    tpu.vector_store %arg5[%c0_48, %c0_49, %c0_50], %150 {strides = array<i32>} : memref<2x16x16xf32, #tpu.memory_space<vmem>>, vector<2x16x16xf32>,
    return
  }
  func.func @transform_0(%arg0: i32) -> (i32, i32, i32) {
    %c0_i32 = arith.constant 0 : i32
    %c0_i32_0 = arith.constant 0 : i32
    %c0_i32_1 = arith.constant 0 : i32
    return %arg0, %c0_i32, %c0_i32_0 : i32, i32, i32
  }
  func.func @transform_1(%arg0: i32) -> (i32, i32, i32) {
    %c0_i32 = arith.constant 0 : i32
    %c0_i32_0 = arith.constant 0 : i32
    %c0_i32_1 = arith.constant 0 : i32
    return %arg0, %c0_i32, %c0_i32_0 : i32, i32, i32
  }
  func.func @transform_2(%arg0: i32) -> (i32, i32, i32) {
    %c0_i32 = arith.constant 0 : i32
    %c0_i32_0 = arith.constant 0 : i32
    %c0_i32_1 = arith.constant 0 : i32
    return %arg0, %c0_i32, %c0_i32_0 : i32, i32, i32
  }
  func.func @transform_3(%arg0: i32) -> (i32, i32, i32) {
    %c0_i32 = arith.constant 0 : i32
    %c0_i32_0 = arith.constant 0 : i32
    %c0_i32_1 = arith.constant 0 : i32
    return %arg0, %c0_i32, %c0_i32_0 : i32, i32, i32
  }
  func.func @transform_4(%arg0: i32) -> (i32, i32, i32) {
    %c0_i32 = arith.constant 0 : i32
    %c0_i32_0 = arith.constant 0 : i32
    %c0_i32_1 = arith.constant 0 : i32
    return %arg0, %c0_i32, %c0_i32_0 : i32, i32, i32
  }
}

</mosaic_0001>

<llo_original>
// kernel: tpu_custom_call.1
$region0: #{tpu_custom_call.1}
  #allocation0 [shape = 'u32[]', space=smem, size = 0x4, offset = 0x4, fixed_abs, tag = 'smem constant byte address 0x4 - core index']
  #allocation1 [shape = 'u32[144,128]{1,0:T(1,128)}', space=vmem, size = 0x12000, scoped, tag = 'internal scratch']
  %s0 = inlined_call_operand.hbm [shape: f32[6,24,24], index: 0, kind: input, shape index: {}]
  %s1 = inlined_call_operand.hbm [shape: f32[6,24,24], index: 1, kind: input, shape index: {}]
  %s2 = inlined_call_operand.hbm [shape: f32[6,16,16], index: 2, kind: output, shape index: {0}]
  %s3 = inlined_call_operand.hbm [shape: f32[6,16,16], index: 3, kind: output, shape index: {1}]
  %s4 = inlined_call_operand.hbm [shape: f32[6,16,16], index: 4, kind: output, shape index: {2}]
  %5 = xla_tuple %s2, %s3, %s4
  %s6 = sld [smem:[#allocation0]]
  $region65: #{tpu_custom_call.1} parent=0
    _
  %s8 = ssub.s32 1, %s6
  %s9 = scalar_select 0, %s8, %s6
  $region1: #{tpu_custom_call.1} parent=0
    #allocation2 [shape = 'u8[49152]{0}', space=vmem, size = 0xc000, scoped, tag = 'input window, operand 0']
    #allocation3 [shape = 's32[2]{0}', space=sflag, size = 0x8, scoped, tag = 'scoped memory for tpu_custom_call.1']
    #allocation4 [shape = 's32[2]{0}', space=sflag, size = 0x8, scoped, tag = 'scoped memory for tpu_custom_call.1']
    #allocation5 [shape = 'u8[49152]{0}', space=vmem, size = 0xc000, scoped, tag = 'input window, operand 1']
    #allocation6 [shape = 's32[2]{0}', space=sflag, size = 0x8, scoped, tag = 'scoped memory for tpu_custom_call.1']
    #allocation7 [shape = 'u8[32768]{0}', space=vmem, size = 0x8000, scoped, tag = 'output window, operand 0']
    #allocation8 [shape = 'u8[32768]{0}', space=vmem, size = 0x8000, scoped, tag = 'output window, operand 1']
    #allocation9 [shape = 's32[2]{0}', space=sflag, size = 0x8, scoped, tag = 'scoped memory for tpu_custom_call.1']
    #allocation10 [shape = 'u8[32768]{0}', space=vmem, size = 0x8000, scoped, tag = 'output window, operand 2']
    %10 = vsyncpa [#allocation3], 0
    %s11 = scalar_lea.sflag [#allocation3], 1
    %12 = vsyncpa %s11, 0
    %13 = vsyncpa [#allocation6], 0
    %s14 = scalar_lea.sflag [#allocation6], 1
    %15 = vsyncpa %s14, 0
    %16 = vsyncpa [#allocation4], 0
    %s17 = scalar_lea.sflag [#allocation4], 1
    %18 = vsyncpa %s17, 0
    %19 = vsyncpa [#allocation9], 0
    %s20 = scalar_lea.sflag [#allocation9], 1
    %21 = vsyncpa %s20, 0
    loop: start=0, step=1, limit=5
    $region2: #{tpu_custom_call.1} parent=1 // loop_pre_header
      _
    $region3: #{tpu_custom_call.1} parent=1 // loop_header
      %s23 = sphi 0, %s27
      %p24 = scmp.ge.s32.totalorder %s23, 5
      %s33 = sphi 0, %s35
      %s36 = sphi 0, %s33
      %s37 = sphi 0, %s36
      %s53 = sphi 0, %s37
      %s59 = sphi 0, %s61
      %s62 = sphi 0, %s59
      %s63 = sphi 0, %s62
      %s79 = sphi 0, %s63
      %s85 = sphi 0, %s87
      %s88 = sphi 0, %s85
      %s89 = sphi 0, %s88
      %s105 = sphi 0, %s89
      %s111 = sphi 0, %s113
      %s114 = sphi 0, %s111
      %s115 = sphi 0, %s114
      %s131 = sphi 0, %s115
      %s137 = sphi 0, %s139
      %s140 = sphi 0, %s137
      %s141 = sphi 0, %s140
      %s157 = sphi 0, %s141
    $region4: #{tpu_custom_call.1} parent=1 // loop_header_branch
      %26 = sbr.rel (%p24) target = $region8
    $region5: #{tpu_custom_call.1} parent=1 // loop_body
      %s28 = ssub.s32 %s23, 1
      %s29 = ssub.s32 %s23, 2
      %s30 = sadd.s32 %s23, 1
      %s31 = ssub.s32 %s23, %s30
      %p32 = scmp.eq.s32.totalorder %s31, 0
      %s34 = sadd.s32 %s33, 1
      %s35 = scalar_select %p32, %s33, %s34
      %p38 = pneg %p32
      %p39 = scmp.eq.s32.totalorder %s23, 2
      %p40 = por %p38, %p39
      %p41 = scmp.ne.s32.totalorder %s33, %s36
      %p42 = scmp.eq.s32.totalorder %s23, 0
      %p43 = por %p41, %p42
      %p44 = scmp.ne.s32.totalorder %s33, %s36
      %p45 = scmp.eq.s32.totalorder %s28, 2
      %p46 = por %p44, %p45
      %p47 = scmp.ne.s32.totalorder %s36, %s37
      %p48 = scmp.eq.s32.totalorder %s28, 0
      %p49 = por %p47, %p48
      %p50 = scmp.ne.s32.totalorder %s36, %s37
      %p51 = scmp.eq.s32.totalorder %s29, 2
      %p52 = por %p50, %p51
      %p54 = scmp.ne.s32.totalorder %s37, %s53
      %p55 = scmp.eq.s32.totalorder %s29, 0
      %p56 = por %p54, %p55
      %s57 = ssub.s32 %s23, %s30
      %p58 = scmp.eq.s32.totalorder %s57, 0
      %s60 = sadd.s32 %s59, 1
      %s61 = scalar_select %p58, %s59, %s60
      %p64 = pneg %p58
      %p65 = scmp.eq.s32.totalorder %s23, 2
      %p66 = por %p64, %p65
      %p67 = scmp.ne.s32.totalorder %s59, %s62
      %p68 = scmp.eq.s32.totalorder %s23, 0
      %p69 = por %p67, %p68
      %p70 = scmp.ne.s32.totalorder %s59, %s62
      %p71 = scmp.eq.s32.totalorder %s28, 2
      %p72 = por %p70, %p71
      %p73 = scmp.ne.s32.totalorder %s62, %s63
      %p74 = scmp.eq.s32.totalorder %s28, 0
      %p75 = por %p73, %p74
      %p76 = scmp.ne.s32.totalorder %s62, %s63
      %p77 = scmp.eq.s32.totalorder %s29, 2
      %p78 = por %p76, %p77
      %p80 = scmp.ne.s32.totalorder %s63, %s79
      %p81 = scmp.eq.s32.totalorder %s29, 0
      %p82 = por %p80, %p81
      %s83 = ssub.s32 %s23, %s30
      %p84 = scmp.eq.s32.totalorder %s83, 0
      %s86 = sadd.s32 %s85, 1
      %s87 = scalar_select %p84, %s85, %s86
      %p90 = pneg %p84
      %p91 = scmp.eq.s32.totalorder %s23, 2
      %p92 = por %p90, %p91
      %p93 = scmp.ne.s32.totalorder %s85, %s88
      %p94 = scmp.eq.s32.totalorder %s23, 0
      %p95 = por %p93, %p94
      %p96 = scmp.ne.s32.totalorder %s85, %s88
      %p97 = scmp.eq.s32.totalorder %s28, 2
      %p98 = por %p96, %p97
      %p99 = scmp.ne.s32.totalorder %s88, %s89
      %p100 = scmp.eq.s32.totalorder %s28, 0
      %p101 = por %p99, %p100
      %p102 = scmp.ne.s32.totalorder %s88, %s89
      %p103 = scmp.eq.s32.totalorder %s29, 2
      %p104 = por %p102, %p103
      %p106 = scmp.ne.s32.totalorder %s89, %s105
      %p107 = scmp.eq.s32.totalorder %s29, 0
      %p108 = por %p106, %p107
      %s109 = ssub.s32 %s23, %s30
      %p110 = scmp.eq.s32.totalorder %s109, 0
      %s112 = sadd.s32 %s111, 1
      %s113 = scalar_select %p110, %s111, %s112
      %p116 = pneg %p110
      %p117 = scmp.eq.s32.totalorder %s23, 2
      %p118 = por %p116, %p117
      %p119 = scmp.ne.s32.totalorder %s111, %s114
      %p120 = scmp.eq.s32.totalorder %s23, 0
      %p121 = por %p119, %p120
      %p122 = scmp.ne.s32.totalorder %s111, %s114
      %p123 = scmp.eq.s32.totalorder %s28, 2
      %p124 = por %p122, %p123
      %p125 = scmp.ne.s32.totalorder %s114, %s115
      %p126 = scmp.eq.s32.totalorder %s28, 0
      %p127 = por %p125, %p126
      %p128 = scmp.ne.s32.totalorder %s114, %s115
      %p129 = scmp.eq.s32.totalorder %s29, 2
      %p130 = por %p128, %p129
      %p132 = scmp.ne.s32.totalorder %s115, %s131
      %p133 = scmp.eq.s32.totalorder %s29, 0
      %p134 = por %p132, %p133
      %s135 = ssub.s32 %s23, %s30
      %p136 = scmp.eq.s32.totalorder %s135, 0
      %s138 = sadd.s32 %s137, 1
      %s139 = scalar_select %p136, %s137, %s138
      %p142 = pneg %p136
      %p143 = scmp.eq.s32.totalorder %s23, 2
      %p144 = por %p142, %p143
      %p145 = scmp.ne.s32.totalorder %s137, %s140
      %p146 = scmp.eq.s32.totalorder %s23, 0
      %p147 = por %p145, %p146
      %p148 = scmp.ne.s32.totalorder %s137, %s140
      %p149 = scmp.eq.s32.totalorder %s28, 2
      %p150 = por %p148, %p149
      %p151 = scmp.ne.s32.totalorder %s140, %s141
      %p152 = scmp.eq.s32.totalorder %s28, 0
      %p153 = por %p151, %p152
      %p154 = scmp.ne.s32.totalorder %s140, %s141
      %p155 = scmp.eq.s32.totalorder %s29, 2
      %p156 = por %p154, %p155
      %p158 = scmp.ne.s32.totalorder %s141, %s157
      %p159 = scmp.eq.s32.totalorder %s29, 0
      %p160 = por %p158, %p159
      %p161 = scmp.le.s32.totalorder 1, %s23
      %p162 = scmp.lt.s32.totalorder %s23, 4
      %p163 = pnand %p161, %p162
      %p164 = pneg %p163
      // Predicated region
      $region9: #{tpu_custom_call.1} parent=5 // pred_check
        _
      $region10: #{tpu_custom_call.1} parent=5 // pred_check_branch
        %166 = sbr.rel (%p163) target = $region12
      $region11: #{tpu_custom_call.1} parent=5 // pred_region
        %s167 = ssub.s32 %s23, 1
      $region12: #{tpu_custom_call.1} parent=5 // pred_fallthru
        _
      %p168 = scmp.lt.s32.totalorder %s23, 3
      // Predicated region
      $region13: #{tpu_custom_call.1} parent=5 // pred_check
        %p169 = pneg %p168
      $region14: #{tpu_custom_call.1} parent=5 // pred_check_branch
        %171 = sbr.rel (%p169) target = $region16
      $region15: #{tpu_custom_call.1} parent=5 // pred_region
        // Predicated region
        $region17: #{tpu_custom_call.1} parent=15 // pred_check
          %p172 = pneg %p43
        $region18: #{tpu_custom_call.1} parent=15 // pred_check_branch
          %174 = sbr.rel (%p172) target = $region20
        $region19: #{tpu_custom_call.1} parent=15 // pred_region
          %s175 = sand.u32 %s33, 1
          %s176 = scalar_lea.sflag [#allocation3], %s175
          %s177 = sand.u32 %s33, 1
          %s178 = smul.addr %s177, 48
          %s179 = scalar_lea.vmem [#allocation2], %s178
          %s180 = smul.u32 2, %s23
          %s182 = ssub.s32 768, 768
          %183 = vsyncadd %s176, %s182
          %s184 = smul.addr %s180, 3
          %s185 = smul.addr %s184, 128
          %s186 = scalar_lea.hbm %s0, %s185
          %s187 = sshll.u32 %s179, 4
          %s188 = int_to_ptr.vmem [resolvable:$true] %s187
          %193 = dma.hbm_to_vmem [thread:$0]  %s186, 768, %s188, %s176, 128, 128, 8
        $region20: #{tpu_custom_call.1} parent=15 // pred_fallthru
          _
        // Predicated region
        $region21: #{tpu_custom_call.1} parent=15 // pred_check
          %p194 = pneg %p69
        $region22: #{tpu_custom_call.1} parent=15 // pred_check_branch
          %196 = sbr.rel (%p194) target = $region24
        $region23: #{tpu_custom_call.1} parent=15 // pred_region
          %s197 = sand.u32 %s59, 1
          %s198 = scalar_lea.sflag [#allocation6], %s197
          %s199 = sand.u32 %s59, 1
          %s200 = smul.addr %s199, 48
          %s201 = scalar_lea.vmem [#allocation5], %s200
          %s202 = smul.u32 2, %s23
          %s204 = ssub.s32 768, 768
          %205 = vsyncadd %s198, %s204
          %s206 = smul.addr %s202, 3
          %s207 = smul.addr %s206, 128
          %s208 = scalar_lea.hbm %s1, %s207
          %s209 = sshll.u32 %s201, 4
          %s210 = int_to_ptr.vmem [resolvable:$true] %s209
          %215 = dma.hbm_to_vmem [thread:$0]  %s208, 768, %s210, %s198, 128, 128, 8
        $region24: #{tpu_custom_call.1} parent=15 // pred_fallthru
          _
      $region16: #{tpu_custom_call.1} parent=5 // pred_fallthru
        _
      %p216 = scmp.le.s32.totalorder 1, %s23
      %p217 = scmp.lt.s32.totalorder %s23, 4
      %p218 = pnand %p216, %p217
      %p219 = pneg %p218
      // Predicated region
      $region25: #{tpu_custom_call.1} parent=5 // pred_check
        _
      $region26: #{tpu_custom_call.1} parent=5 // pred_check_branch
        %221 = sbr.rel (%p218) target = $region28
      $region27: #{tpu_custom_call.1} parent=5 // pred_region
        %s222 = ssub.s32 %s23, 1
        %s223 = sand.u32 %s36, 1
        %s224 = scalar_lea.sflag [#allocation3], %s223
        %s225 = sand.u32 %s36, 1
        %s226 = smul.addr %s225, 48
        %s227 = scalar_lea.vmem [#allocation2], %s226
        // Predicated region
        $region29: #{tpu_custom_call.1} parent=27 // pred_check
          %p228 = pneg %p49
        $region30: #{tpu_custom_call.1} parent=27 // pred_check_branch
          %230 = sbr.rel (%p228) target = $region32
        $region31: #{tpu_custom_call.1} parent=27 // pred_region
          %231 = dma.done %s224, 768
        $region32: #{tpu_custom_call.1} parent=27 // pred_fallthru
          _
        %s232 = sand.u32 %s62, 1
        %s233 = scalar_lea.sflag [#allocation6], %s232
        %s234 = sand.u32 %s62, 1
        %s235 = smul.addr %s234, 48
        %s236 = scalar_lea.vmem [#allocation5], %s235
        // Predicated region
        $region33: #{tpu_custom_call.1} parent=27 // pred_check
          %p237 = pneg %p75
        $region34: #{tpu_custom_call.1} parent=27 // pred_check_branch
          %239 = sbr.rel (%p237) target = $region36
        $region35: #{tpu_custom_call.1} parent=27 // pred_region
          %240 = dma.done %s233, 768
        $region36: #{tpu_custom_call.1} parent=27 // pred_fallthru
          _
        %s241 = sand.u32 %s36, 1
        %s242 = scalar_lea.sflag [#allocation3], %s241
        %s243 = sand.u32 %s36, 1
        %s244 = smul.addr %s243, 48
        %s245 = scalar_lea.vmem [#allocation2], %s244
        %p246 = pneg %p49
        %p247 = pneg %p46
        %s248 = sand.u32 %s62, 1
        %s249 = scalar_lea.sflag [#allocation6], %s248
        %s250 = sand.u32 %s62, 1
        %s251 = smul.addr %s250, 48
        %s252 = scalar_lea.vmem [#allocation5], %s251
        %p253 = pneg %p75
        %p254 = pneg %p72
        %p255 = pneg %p101
        %p256 = pneg %p98
        %s257 = sand.u32 %s88, 1
        %s258 = scalar_lea.sflag [#allocation4], %s257
        %s259 = sand.u32 %s88, 1
        %s260 = smul.addr %s259, 32
        %s261 = scalar_lea.vmem [#allocation7], %s260
        %p262 = pneg %p127
        %p263 = pneg %p124
        %s264 = sand.u32 %s28, 1
        %s265 = scalar_lea.sflag [#allocation9], %s264
        %s266 = sand.u32 %s114, 1
        %s267 = smul.addr %s266, 32
        %s268 = scalar_lea.vmem [#allocation8], %s267
        %p269 = pneg %p153
        %p270 = pneg %p150
        %s271 = sand.u32 %s28, 1
        %s272 = scalar_lea.sflag [#allocation9], %s271
        %s273 = sand.u32 %s140, 1
        %s274 = smul.addr %s273, 32
        %s275 = scalar_lea.vmem [#allocation10], %s274
        %s276 = smul.u32 2, %s28
        %s277 = smul.u32 2, %s28
        %s278 = smul.u32 2, %s28
        %s279 = smul.u32 2, %s28
        %s280 = smul.u32 2, %s28
        %v281 = vld [vmem:[%s227] sm:$0xff]
        %v282 = vld [vmem:[%s227 + $0x8] sm:$0xff]
        %v283 = vld [vmem:[%s227 + $0x10] sm:$0xff]
        %v284 = vld [vmem:[%s227 + $0x18] sm:$0xff]
        %v285 = vld [vmem:[%s227 + $0x20] sm:$0xff]
        %v286 = vld [vmem:[%s227 + $0x28] sm:$0xff]
        %v287 = vld [vmem:[%s236] sm:$0xff]
        %v288 = vld [vmem:[%s236 + $0x8] sm:$0xff]
        %v289 = vld [vmem:[%s236 + $0x10] sm:$0xff]
        %v290 = vld [vmem:[%s236 + $0x18] sm:$0xff]
        %v291 = vld [vmem:[%s236 + $0x20] sm:$0xff]
        %v292 = vld [vmem:[%s236 + $0x28] sm:$0xff]
        %v293 = vmul.f32 %v281, 0.02763055
        %v294 = vmul.f32 %v282, 0.02763055
        %v295 = vmul.f32 %v283, 0.02763055
        %v296 = vmul.f32 %v284, 0.02763055
        %v297 = vmul.f32 %v285, 0.02763055
        %v298 = vmul.f32 %v286, 0.02763055
        %v299 = vmul.f32 %v281, 0.06628224
        %v300 = vmul.f32 %v282, 0.06628224
        %v301 = vmul.f32 %v283, 0.06628224
        %v302 = vmul.f32 %v284, 0.06628224
        %v303 = vmul.f32 %v285, 0.06628224
        %v304 = vmul.f32 %v286, 0.06628224
        %v305 = vmul.f32 %v281, 0.12383154
        %v306 = vmul.f32 %v282, 0.12383154
        %v307 = vmul.f32 %v283, 0.12383154
        %v308 = vmul.f32 %v284, 0.12383154
        %v309 = vmul.f32 %v285, 0.12383154
        %v310 = vmul.f32 %v286, 0.12383154
        %v311 = vmul.f32 %v281, 0.18017383
        %v312 = vmul.f32 %v282, 0.18017383
        %v313 = vmul.f32 %v283, 0.18017383
        %v314 = vmul.f32 %v284, 0.18017383
        %v315 = vmul.f32 %v285, 0.18017383
        %v316 = vmul.f32 %v286, 0.18017383
        %v317 = vmul.f32 %v281, 0.20416369
        %v318 = vmul.f32 %v282, 0.20416369
        %v319 = vmul.f32 %v283, 0.20416369
        %v320 = vmul.f32 %v284, 0.20416369
        %v321 = vmul.f32 %v285, 0.20416369
        %v322 = vmul.f32 %v286, 0.20416369
        %329 = vrot.lane.b32.xlu0 %v317, 124
        %v330 = vpop.permute.xlu0 %329
        %331 = vrot.lane.b32.xlu0 %v318, 124
        %v332 = vpop.permute.xlu0 %331
        %333 = vrot.lane.b32.xlu0 %v319, 124
        %v334 = vpop.permute.xlu0 %333
        %335 = vrot.lane.b32.xlu0 %v320, 124
        %v336 = vpop.permute.xlu0 %335
        %337 = vrot.lane.b32.xlu0 %v321, 124
        %v338 = vpop.permute.xlu0 %337
        %339 = vrot.lane.b32.xlu0 %v322, 124
        %v340 = vpop.permute.xlu0 %339
        %v347 = vadd.f32 %v293, %v330
        %v348 = vadd.f32 %v294, %v332
        %v349 = vadd.f32 %v295, %v334
        %v350 = vadd.f32 %v296, %v336
        %v351 = vadd.f32 %v297, %v338
        %v352 = vadd.f32 %v298, %v340
        %359 = vrot.lane.b32.xlu0 %v311, 124
        %v360 = vpop.permute.xlu0 %359
        %361 = vrot.lane.b32.xlu0 %v312, 124
        %v362 = vpop.permute.xlu0 %361
        %363 = vrot.lane.b32.xlu0 %v313, 124
        %v364 = vpop.permute.xlu0 %363
        %365 = vrot.lane.b32.xlu0 %v314, 124
        %v366 = vpop.permute.xlu0 %365
        %367 = vrot.lane.b32.xlu0 %v315, 124
        %v368 = vpop.permute.xlu0 %367
        %369 = vrot.lane.b32.xlu0 %v316, 124
        %v370 = vpop.permute.xlu0 %369
        %v377 = vadd.f32 %v299, %v360
        %v378 = vadd.f32 %v300, %v362
        %v379 = vadd.f32 %v301, %v364
        %v380 = vadd.f32 %v302, %v366
        %v381 = vadd.f32 %v303, %v368
        %v382 = vadd.f32 %v304, %v370
        %389 = vrot.lane.b32.xlu0 %v305, 124
        %v390 = vpop.permute.xlu0 %389
        %391 = vrot.lane.b32.xlu0 %v306, 124
        %v392 = vpop.permute.xlu0 %391
        %393 = vrot.lane.b32.xlu0 %v307, 124
        %v394 = vpop.permute.xlu0 %393
        %395 = vrot.lane.b32.xlu0 %v308, 124
        %v396 = vpop.permute.xlu0 %395
        %397 = vrot.lane.b32.xlu0 %v309, 124
        %v398 = vpop.permute.xlu0 %397
        %399 = vrot.lane.b32.xlu0 %v310, 124
        %v400 = vpop.permute.xlu0 %399
        %v407 = vadd.f32 %v305, %v390
        %v408 = vadd.f32 %v306, %v392
        %v409 = vadd.f32 %v307, %v394
        %v410 = vadd.f32 %v308, %v396
        %v411 = vadd.f32 %v309, %v398
        %v412 = vadd.f32 %v310, %v400
        %419 = vrot.lane.b32.xlu0 %v299, 124
        %v420 = vpop.permute.xlu0 %419
        %421 = vrot.lane.b32.xlu0 %v300, 124
        %v422 = vpop.permute.xlu0 %421
        %423 = vrot.lane.b32.xlu0 %v301, 124
        %v424 = vpop.permute.xlu0 %423
        %425 = vrot.lane.b32.xlu0 %v302, 124
        %v426 = vpop.permute.xlu0 %425
        %427 = vrot.lane.b32.xlu0 %v303, 124
        %v428 = vpop.permute.xlu0 %427
        %429 = vrot.lane.b32.xlu0 %v304, 124
        %v430 = vpop.permute.xlu0 %429
        %v437 = vadd.f32 %v311, %v420
        %v438 = vadd.f32 %v312, %v422
        %v439 = vadd.f32 %v313, %v424
        %v440 = vadd.f32 %v314, %v426
        %v441 = vadd.f32 %v315, %v428
        %v442 = vadd.f32 %v316, %v430
        %449 = vrot.lane.b32.xlu0 %v293, 120
        %v450 = vpop.permute.xlu0 %449
        %451 = vrot.lane.b32.xlu0 %v294, 120
        %v452 = vpop.permute.xlu0 %451
        %453 = vrot.lane.b32.xlu0 %v295, 120
        %v454 = vpop.permute.xlu0 %453
        %455 = vrot.lane.b32.xlu0 %v296, 120
        %v456 = vpop.permute.xlu0 %455
        %457 = vrot.lane.b32.xlu0 %v297, 120
        %v458 = vpop.permute.xlu0 %457
        %459 = vrot.lane.b32.xlu0 %v298, 120
        %v460 = vpop.permute.xlu0 %459
        %v467 = vadd.f32 %v347, %v450
        %v468 = vadd.f32 %v348, %v452
        %v469 = vadd.f32 %v349, %v454
        %v470 = vadd.f32 %v350, %v456
        %v471 = vadd.f32 %v351, %v458
        %v472 = vadd.f32 %v352, %v460
        %479 = vrot.lane.b32.xlu0 %v377, 127
        %v480 = vpop.permute.xlu0 %479
        %481 = vrot.lane.b32.xlu0 %v378, 127
        %v482 = vpop.permute.xlu0 %481
        %483 = vrot.lane.b32.xlu0 %v379, 127
        %v484 = vpop.permute.xlu0 %483
        %485 = vrot.lane.b32.xlu0 %v380, 127
        %v486 = vpop.permute.xlu0 %485
        %487 = vrot.lane.b32.xlu0 %v381, 127
        %v488 = vpop.permute.xlu0 %487
        %489 = vrot.lane.b32.xlu0 %v382, 127
        %v490 = vpop.permute.xlu0 %489
        %v497 = vadd.f32 %v467, %v480
        %v498 = vadd.f32 %v468, %v482
        %v499 = vadd.f32 %v469, %v484
        %v500 = vadd.f32 %v470, %v486
        %v501 = vadd.f32 %v471, %v488
        %v502 = vadd.f32 %v472, %v490
        %509 = vrot.lane.b32.xlu0 %v437, 127
        %v510 = vpop.permute.xlu0 %509
        %511 = vrot.lane.b32.xlu0 %v438, 127
        %v512 = vpop.permute.xlu0 %511
        %513 = vrot.lane.b32.xlu0 %v439, 127
        %v514 = vpop.permute.xlu0 %513
        %515 = vrot.lane.b32.xlu0 %v440, 127
        %v516 = vpop.permute.xlu0 %515
        %517 = vrot.lane.b32.xlu0 %v441, 127
        %v518 = vpop.permute.xlu0 %517
        %519 = vrot.lane.b32.xlu0 %v442, 127
        %v520 = vpop.permute.xlu0 %519
        %v527 = vadd.f32 %v407, %v510
        %v528 = vadd.f32 %v408, %v512
        %v529 = vadd.f32 %v409, %v514
        %v530 = vadd.f32 %v410, %v516
        %v531 = vadd.f32 %v411, %v518
        %v532 = vadd.f32 %v412, %v520
        %539 = vrot.lane.b32.xlu0 %v527, 126
        %v540 = vpop.permute.xlu0 %539
        %541 = vrot.lane.b32.xlu0 %v528, 126
        %v542 = vpop.permute.xlu0 %541
        %543 = vrot.lane.b32.xlu0 %v529, 126
        %v544 = vpop.permute.xlu0 %543
        %545 = vrot.lane.b32.xlu0 %v530, 126
        %v546 = vpop.permute.xlu0 %545
        %547 = vrot.lane.b32.xlu0 %v531, 126
        %v548 = vpop.permute.xlu0 %547
        %549 = vrot.lane.b32.xlu0 %v532, 126
        %v550 = vpop.permute.xlu0 %549
        %v557 = vadd.f32 %v497, %v540
        %v558 = vadd.f32 %v498, %v542
        %v559 = vadd.f32 %v499, %v544
        %v560 = vadd.f32 %v500, %v546
        %v561 = vadd.f32 %v501, %v548
        %v562 = vadd.f32 %v502, %v550
        %v563 = vmul.f32 %v557, 0.02763055
        %v564 = vmul.f32 %v558, 0.02763055
        %v565 = vmul.f32 %v560, 0.02763055
        %v566 = vmul.f32 %v561, 0.02763055
        %v567 = vmul.f32 %v557, 0.06628224
        %v568 = vmul.f32 %v558, 0.06628224
        %v569 = vmul.f32 %v559, 0.06628224
        %v570 = vmul.f32 %v560, 0.06628224
        %v571 = vmul.f32 %v561, 0.06628224
        %v572 = vmul.f32 %v562, 0.06628224
        %v573 = vmul.f32 %v557, 0.12383154
        %v574 = vmul.f32 %v558, 0.12383154
        %v575 = vmul.f32 %v559, 0.12383154
        %v576 = vmul.f32 %v560, 0.12383154
        %v577 = vmul.f32 %v561, 0.12383154
        %v578 = vmul.f32 %v562, 0.12383154
        %v579 = vmul.f32 %v557, 0.18017383
        %v580 = vmul.f32 %v558, 0.18017383
        %v581 = vmul.f32 %v559, 0.18017383
        %v582 = vmul.f32 %v560, 0.18017383
        %v583 = vmul.f32 %v561, 0.18017383
        %v584 = vmul.f32 %v562, 0.18017383
        %v585 = vmul.f32 %v557, 0.20416369
        %v586 = vmul.f32 %v558, 0.20416369
        %v587 = vmul.f32 %v559, 0.20416369
        %v588 = vmul.f32 %v560, 0.20416369
        %v589 = vmul.f32 %v561, 0.20416369
        %v590 = vmul.f32 %v562, 0.20416369
        %vm597 = vcmask 1043456
        %v598 = vrot.slane %v585, 4
        %v599 = vrot.slane %v586, 4
        %v600 = vsel %vm597, %v598, %v599
        %v601 = vrot.slane %v587, 4
        %v602 = vsel %vm597, %v599, %v601
        %v603 = vrot.slane %v588, 4
        %v604 = vrot.slane %v589, 4
        %v605 = vsel %vm597, %v603, %v604
        %v606 = vrot.slane %v590, 4
        %v607 = vsel %vm597, %v604, %v606
        %v612 = vadd.f32 %v563, %v600
        %v613 = vadd.f32 %v564, %v602
        %v614 = vadd.f32 %v565, %v605
        %v615 = vadd.f32 %v566, %v607
        %v622 = vrot.slane %v579, 4
        %v623 = vrot.slane %v580, 4
        %v624 = vsel %vm597, %v622, %v623
        %v625 = vrot.slane %v581, 4
        %v626 = vsel %vm597, %v623, %v625
        %v627 = vrot.slane %v582, 4
        %v628 = vrot.slane %v583, 4
        %v629 = vsel %vm597, %v627, %v628
        %v630 = vrot.slane %v584, 4
        %v631 = vsel %vm597, %v628, %v630
        %v638 = vadd.f32 %v567, %v624
        %v639 = vadd.f32 %v568, %v626
        %v640 = vadd.f32 %v569, %v625
        %v641 = vadd.f32 %v570, %v629
        %v642 = vadd.f32 %v571, %v631
        %v643 = vadd.f32 %v572, %v630
        %v650 = vrot.slane %v573, 4
        %v651 = vrot.slane %v574, 4
        %v652 = vsel %vm597, %v650, %v651
        %v653 = vrot.slane %v575, 4
        %v654 = vsel %vm597, %v651, %v653
        %v655 = vrot.slane %v576, 4
        %v656 = vrot.slane %v577, 4
        %v657 = vsel %vm597, %v655, %v656
        %v658 = vrot.slane %v578, 4
        %v659 = vsel %vm597, %v656, %v658
        %v666 = vadd.f32 %v573, %v652
        %v667 = vadd.f32 %v574, %v654
        %v668 = vadd.f32 %v575, %v653
        %v669 = vadd.f32 %v576, %v657
        %v670 = vadd.f32 %v577, %v659
        %v671 = vadd.f32 %v578, %v658
        %v678 = vrot.slane %v567, 4
        %v679 = vrot.slane %v568, 4
        %v680 = vsel %vm597, %v678, %v679
        %v681 = vrot.slane %v569, 4
        %v682 = vsel %vm597, %v679, %v681
        %v683 = vrot.slane %v570, 4
        %v684 = vrot.slane %v571, 4
        %v685 = vsel %vm597, %v683, %v684
        %v686 = vrot.slane %v572, 4
        %v687 = vsel %vm597, %v684, %v686
        %v694 = vadd.f32 %v579, %v680
        %v695 = vadd.f32 %v580, %v682
        %v696 = vadd.f32 %v581, %v681
        %v697 = vadd.f32 %v582, %v685
        %v698 = vadd.f32 %v583, %v687
        %v699 = vadd.f32 %v584, %v686
        %v700 = vmul.f32 %v559, 0.02763055
        %v701 = vmul.f32 %v562, 0.02763055
        %v702 = vadd.f32 %v612, %v564
        %v703 = vadd.f32 %v613, %v700
        %v704 = vadd.f32 %v614, %v566
        %v705 = vadd.f32 %v615, %v701
        %vm712 = vcmask 1046528
        %v713 = vrot.slane %v638, 1
        %v714 = vrot.slane %v639, 1
        %v715 = vsel %vm712, %v713, %v714
        %v716 = vrot.slane %v640, 1
        %v717 = vsel %vm712, %v714, %v716
        %v718 = vrot.slane %v641, 1
        %v719 = vrot.slane %v642, 1
        %v720 = vsel %vm712, %v718, %v719
        %v721 = vrot.slane %v643, 1
        %v722 = vsel %vm712, %v719, %v721
        %v727 = vadd.f32 %v702, %v715
        %v728 = vadd.f32 %v703, %v717
        %v729 = vadd.f32 %v704, %v720
        %v730 = vadd.f32 %v705, %v722
        %v737 = vrot.slane %v694, 1
        %v738 = vrot.slane %v695, 1
        %v739 = vsel %vm712, %v737, %v738
        %v740 = vrot.slane %v696, 1
        %v741 = vsel %vm712, %v738, %v740
        %v742 = vrot.slane %v697, 1
        %v743 = vrot.slane %v698, 1
        %v744 = vsel %vm712, %v742, %v743
        %v745 = vrot.slane %v699, 1
        %v746 = vsel %vm712, %v743, %v745
        %v753 = vadd.f32 %v666, %v739
        %v754 = vadd.f32 %v667, %v741
        %v755 = vadd.f32 %v668, %v740
        %v756 = vadd.f32 %v669, %v744
        %v757 = vadd.f32 %v670, %v746
        %v758 = vadd.f32 %v671, %v745
        %vm765 = vcmask 1045504
        %v766 = vrot.slane %v753, 2
        %v767 = vrot.slane %v754, 2
        %v768 = vsel %vm765, %v766, %v767
        %v769 = vrot.slane %v755, 2
        %v770 = vsel %vm765, %v767, %v769
        %v771 = vrot.slane %v756, 2
        %v772 = vrot.slane %v757, 2
        %v773 = vsel %vm765, %v771, %v772
        %v774 = vrot.slane %v758, 2
        %v775 = vsel %vm765, %v772, %v774
        %v780 = vadd.f32 %v727, %v768
        %v781 = vadd.f32 %v728, %v770
        %v782 = vadd.f32 %v729, %v773
        %v783 = vadd.f32 %v730, %v775
        %v784 = vmul.f32 %v287, 0.02763055
        %v785 = vmul.f32 %v288, 0.02763055
        %v786 = vmul.f32 %v289, 0.02763055
        %v787 = vmul.f32 %v290, 0.02763055
        %v788 = vmul.f32 %v291, 0.02763055
        %v789 = vmul.f32 %v292, 0.02763055
        %v790 = vmul.f32 %v287, 0.06628224
        %v791 = vmul.f32 %v288, 0.06628224
        %v792 = vmul.f32 %v289, 0.06628224
        %v793 = vmul.f32 %v290, 0.06628224
        %v794 = vmul.f32 %v291, 0.06628224
        %v795 = vmul.f32 %v292, 0.06628224
        %v796 = vmul.f32 %v287, 0.12383154
        %v797 = vmul.f32 %v288, 0.12383154
        %v798 = vmul.f32 %v289, 0.12383154
        %v799 = vmul.f32 %v290, 0.12383154
        %v800 = vmul.f32 %v291, 0.12383154
        %v801 = vmul.f32 %v292, 0.12383154
        %v802 = vmul.f32 %v287, 0.18017383
        %v803 = vmul.f32 %v288, 0.18017383
        %v804 = vmul.f32 %v289, 0.18017383
        %v805 = vmul.f32 %v290, 0.18017383
        %v806 = vmul.f32 %v291, 0.18017383
        %v807 = vmul.f32 %v292, 0.18017383
        %v808 = vmul.f32 %v287, 0.20416369
        %v809 = vmul.f32 %v288, 0.20416369
        %v810 = vmul.f32 %v289, 0.20416369
        %v811 = vmul.f32 %v290, 0.20416369
        %v812 = vmul.f32 %v291, 0.20416369
        %v813 = vmul.f32 %v292, 0.20416369
        %820 = vrot.lane.b32.xlu0 %v808, 124
        %v821 = vpop.permute.xlu0 %820
        %822 = vrot.lane.b32.xlu0 %v809, 124
        %v823 = vpop.permute.xlu0 %822
        %824 = vrot.lane.b32.xlu0 %v810, 124
        %v825 = vpop.permute.xlu0 %824
        %826 = vrot.lane.b32.xlu0 %v811, 124
        %v827 = vpop.permute.xlu0 %826
        %828 = vrot.lane.b32.xlu0 %v812, 124
        %v829 = vpop.permute.xlu0 %828
        %830 = vrot.lane.b32.xlu0 %v813, 124
        %v831 = vpop.permute.xlu0 %830
        %v838 = vadd.f32 %v784, %v821
        %v839 = vadd.f32 %v785, %v823
        %v840 = vadd.f32 %v786, %v825
        %v841 = vadd.f32 %v787, %v827
        %v842 = vadd.f32 %v788, %v829
        %v843 = vadd.f32 %v789, %v831
        %850 = vrot.lane.b32.xlu0 %v802, 124
        %v851 = vpop.permute.xlu0 %850
        %852 = vrot.lane.b32.xlu0 %v803, 124
        %v853 = vpop.permute.xlu0 %852
        %854 = vrot.lane.b32.xlu0 %v804, 124
        %v855 = vpop.permute.xlu0 %854
        %856 = vrot.lane.b32.xlu0 %v805, 124
        %v857 = vpop.permute.xlu0 %856
        %858 = vrot.lane.b32.xlu0 %v806, 124
        %v859 = vpop.permute.xlu0 %858
        %860 = vrot.lane.b32.xlu0 %v807, 124
        %v861 = vpop.permute.xlu0 %860
        %v868 = vadd.f32 %v790, %v851
        %v869 = vadd.f32 %v791, %v853
        %v870 = vadd.f32 %v792, %v855
        %v871 = vadd.f32 %v793, %v857
        %v872 = vadd.f32 %v794, %v859
        %v873 = vadd.f32 %v795, %v861
        %880 = vrot.lane.b32.xlu0 %v796, 124
        %v881 = vpop.permute.xlu0 %880
        %882 = vrot.lane.b32.xlu0 %v797, 124
        %v883 = vpop.permute.xlu0 %882
        %884 = vrot.lane.b32.xlu0 %v798, 124
        %v885 = vpop.permute.xlu0 %884
        %886 = vrot.lane.b32.xlu0 %v799, 124
        %v887 = vpop.permute.xlu0 %886
        %888 = vrot.lane.b32.xlu0 %v800, 124
        %v889 = vpop.permute.xlu0 %888
        %890 = vrot.lane.b32.xlu0 %v801, 124
        %v891 = vpop.permute.xlu0 %890
        %v898 = vadd.f32 %v796, %v881
        %v899 = vadd.f32 %v797, %v883
        %v900 = vadd.f32 %v798, %v885
        %v901 = vadd.f32 %v799, %v887
        %v902 = vadd.f32 %v800, %v889
        %v903 = vadd.f32 %v801, %v891
        %910 = vrot.lane.b32.xlu0 %v790, 124
        %v911 = vpop.permute.xlu0 %910
        %912 = vrot.lane.b32.xlu0 %v791, 124
        %v913 = vpop.permute.xlu0 %912
        %914 = vrot.lane.b32.xlu0 %v792, 124
        %v915 = vpop.permute.xlu0 %914
        %916 = vrot.lane.b32.xlu0 %v793, 124
        %v917 = vpop.permute.xlu0 %916
        %918 = vrot.lane.b32.xlu0 %v794, 124
        %v919 = vpop.permute.xlu0 %918
        %920 = vrot.lane.b32.xlu0 %v795, 124
        %v921 = vpop.permute.xlu0 %920
        %v928 = vadd.f32 %v802, %v911
        %v929 = vadd.f32 %v803, %v913
        %v930 = vadd.f32 %v804, %v915
        %v931 = vadd.f32 %v805, %v917
        %v932 = vadd.f32 %v806, %v919
        %v933 = vadd.f32 %v807, %v921
        %940 = vrot.lane.b32.xlu0 %v784, 120
        %v941 = vpop.permute.xlu0 %940
        %942 = vrot.lane.b32.xlu0 %v785, 120
        %v943 = vpop.permute.xlu0 %942
        %944 = vrot.lane.b32.xlu0 %v786, 120
        %v945 = vpop.permute.xlu0 %944
        %946 = vrot.lane.b32.xlu0 %v787, 120
        %v947 = vpop.permute.xlu0 %946
        %948 = vrot.lane.b32.xlu0 %v788, 120
        %v949 = vpop.permute.xlu0 %948
        %950 = vrot.lane.b32.xlu0 %v789, 120
        %v951 = vpop.permute.xlu0 %950
        %v958 = vadd.f32 %v838, %v941
        %v959 = vadd.f32 %v839, %v943
        %v960 = vadd.f32 %v840, %v945
        %v961 = vadd.f32 %v841, %v947
        %v962 = vadd.f32 %v842, %v949
        %v963 = vadd.f32 %v843, %v951
        %970 = vrot.lane.b32.xlu0 %v868, 127
        %v971 = vpop.permute.xlu0 %970
        %972 = vrot.lane.b32.xlu0 %v869, 127
        %v973 = vpop.permute.xlu0 %972
        %974 = vrot.lane.b32.xlu0 %v870, 127
        %v975 = vpop.permute.xlu0 %974
        %976 = vrot.lane.b32.xlu0 %v871, 127
        %v977 = vpop.permute.xlu0 %976
        %978 = vrot.lane.b32.xlu0 %v872, 127
        %v979 = vpop.permute.xlu0 %978
        %980 = vrot.lane.b32.xlu0 %v873, 127
        %v981 = vpop.permute.xlu0 %980
        %v988 = vadd.f32 %v958, %v971
        %v989 = vadd.f32 %v959, %v973
        %v990 = vadd.f32 %v960, %v975
        %v991 = vadd.f32 %v961, %v977
        %v992 = vadd.f32 %v962, %v979
        %v993 = vadd.f32 %v963, %v981
        %1000 = vrot.lane.b32.xlu0 %v928, 127
        %v1001 = vpop.permute.xlu0 %1000
        %1002 = vrot.lane.b32.xlu0 %v929, 127
        %v1003 = vpop.permute.xlu0 %1002
        %1004 = vrot.lane.b32.xlu0 %v930, 127
        %v1005 = vpop.permute.xlu0 %1004
        %1006 = vrot.lane.b32.xlu0 %v931, 127
        %v1007 = vpop.permute.xlu0 %1006
        %1008 = vrot.lane.b32.xlu0 %v932, 127
        %v1009 = vpop.permute.xlu0 %1008
        %1010 = vrot.lane.b32.xlu0 %v933, 127
        %v1011 = vpop.permute.xlu0 %1010
        %v1018 = vadd.f32 %v898, %v1001
        %v1019 = vadd.f32 %v899, %v1003
        %v1020 = vadd.f32 %v900, %v1005
        %v1021 = vadd.f32 %v901, %v1007
        %v1022 = vadd.f32 %v902, %v1009
        %v1023 = vadd.f32 %v903, %v1011
        %1030 = vrot.lane.b32.xlu0 %v1018, 126
        %v1031 = vpop.permute.xlu0 %1030
        %1032 = vrot.lane.b32.xlu0 %v1019, 126
        %v1033 = vpop.permute.xlu0 %1032
        %1034 = vrot.lane.b32.xlu0 %v1020, 126
        %v1035 = vpop.permute.xlu0 %1034
        %1036 = vrot.lane.b32.xlu0 %v1021, 126
        %v1037 = vpop.permute.xlu0 %1036
        %1038 = vrot.lane.b32.xlu0 %v1022, 126
        %v1039 = vpop.permute.xlu0 %1038
        %1040 = vrot.lane.b32.xlu0 %v1023, 126
        %v1041 = vpop.permute.xlu0 %1040
        %v1048 = vadd.f32 %v988, %v1031
        %v1049 = vadd.f32 %v989, %v1033
        %v1050 = vadd.f32 %v990, %v1035
        %v1051 = vadd.f32 %v991, %v1037
        %v1052 = vadd.f32 %v992, %v1039
        %v1053 = vadd.f32 %v993, %v1041
        %v1054 = vmul.f32 %v1048, 0.02763055
        %v1055 = vmul.f32 %v1049, 0.02763055
        %v1056 = vmul.f32 %v1051, 0.02763055
        %v1057 = vmul.f32 %v1052, 0.02763055
        %v1058 = vmul.f32 %v1048, 0.06628224
        %v1059 = vmul.f32 %v1049, 0.06628224
        %v1060 = vmul.f32 %v1050, 0.06628224
        %v1061 = vmul.f32 %v1051, 0.06628224
        %v1062 = vmul.f32 %v1052, 0.06628224
        %v1063 = vmul.f32 %v1053, 0.06628224
        %v1064 = vmul.f32 %v1048, 0.12383154
        %v1065 = vmul.f32 %v1049, 0.12383154
        %v1066 = vmul.f32 %v1050, 0.12383154
        %v1067 = vmul.f32 %v1051, 0.12383154
        %v1068 = vmul.f32 %v1052, 0.12383154
        %v1069 = vmul.f32 %v1053, 0.12383154
        %v1070 = vmul.f32 %v1048, 0.18017383
        %v1071 = vmul.f32 %v1049, 0.18017383
        %v1072 = vmul.f32 %v1050, 0.18017383
        %v1073 = vmul.f32 %v1051, 0.18017383
        %v1074 = vmul.f32 %v1052, 0.18017383
        %v1075 = vmul.f32 %v1053, 0.18017383
        %v1076 = vmul.f32 %v1048, 0.20416369
        %v1077 = vmul.f32 %v1049, 0.20416369
        %v1078 = vmul.f32 %v1050, 0.20416369
        %v1079 = vmul.f32 %v1051, 0.20416369
        %v1080 = vmul.f32 %v1052, 0.20416369
        %v1081 = vmul.f32 %v1053, 0.20416369
        %v1088 = vrot.slane %v1076, 4
        %v1089 = vrot.slane %v1077, 4
        %v1090 = vsel %vm597, %v1088, %v1089
        %v1091 = vrot.slane %v1078, 4
        %v1092 = vsel %vm597, %v1089, %v1091
        %v1093 = vrot.slane %v1079, 4
        %v1094 = vrot.slane %v1080, 4
        %v1095 = vsel %vm597, %v1093, %v1094
        %v1096 = vrot.slane %v1081, 4
        %v1097 = vsel %vm597, %v1094, %v1096
        %v1102 = vadd.f32 %v1054, %v1090
        %v1103 = vadd.f32 %v1055, %v1092
        %v1104 = vadd.f32 %v1056, %v1095
        %v1105 = vadd.f32 %v1057, %v1097
        %v1112 = vrot.slane %v1070, 4
        %v1113 = vrot.slane %v1071, 4
        %v1114 = vsel %vm597, %v1112, %v1113
        %v1115 = vrot.slane %v1072, 4
        %v1116 = vsel %vm597, %v1113, %v1115
        %v1117 = vrot.slane %v1073, 4
        %v1118 = vrot.slane %v1074, 4
        %v1119 = vsel %vm597, %v1117, %v1118
        %v1120 = vrot.slane %v1075, 4
        %v1121 = vsel %vm597, %v1118, %v1120
        %v1128 = vadd.f32 %v1058, %v1114
        %v1129 = vadd.f32 %v1059, %v1116
        %v1130 = vadd.f32 %v1060, %v1115
        %v1131 = vadd.f32 %v1061, %v1119
        %v1132 = vadd.f32 %v1062, %v1121
        %v1133 = vadd.f32 %v1063, %v1120
        %v1140 = vrot.slane %v1064, 4
        %v1141 = vrot.slane %v1065, 4
        %v1142 = vsel %vm597, %v1140, %v1141
        %v1143 = vrot.slane %v1066, 4
        %v1144 = vsel %vm597, %v1141, %v1143
        %v1145 = vrot.slane %v1067, 4
        %v1146 = vrot.slane %v1068, 4
        %v1147 = vsel %vm597, %v1145, %v1146
        %v1148 = vrot.slane %v1069, 4
        %v1149 = vsel %vm597, %v1146, %v1148
        %v1156 = vadd.f32 %v1064, %v1142
        %v1157 = vadd.f32 %v1065, %v1144
        %v1158 = vadd.f32 %v1066, %v1143
        %v1159 = vadd.f32 %v1067, %v1147
        %v1160 = vadd.f32 %v1068, %v1149
        %v1161 = vadd.f32 %v1069, %v1148
        %v1168 = vrot.slane %v1058, 4
        %v1169 = vrot.slane %v1059, 4
        %v1170 = vsel %vm597, %v1168, %v1169
        %v1171 = vrot.slane %v1060, 4
        %v1172 = vsel %vm597, %v1169, %v1171
        %v1173 = vrot.slane %v1061, 4
        %v1174 = vrot.slane %v1062, 4
        %v1175 = vsel %vm597, %v1173, %v1174
        %v1176 = vrot.slane %v1063, 4
        %v1177 = vsel %vm597, %v1174, %v1176
        %v1184 = vadd.f32 %v1070, %v1170
        %v1185 = vadd.f32 %v1071, %v1172
        %v1186 = vadd.f32 %v1072, %v1171
        %v1187 = vadd.f32 %v1073, %v1175
        %v1188 = vadd.f32 %v1074, %v1177
        %v1189 = vadd.f32 %v1075, %v1176
        %v1190 = vmul.f32 %v1050, 0.02763055
        %v1191 = vmul.f32 %v1053, 0.02763055
        %v1192 = vadd.f32 %v1102, %v1055
        %v1193 = vadd.f32 %v1103, %v1190
        %v1194 = vadd.f32 %v1104, %v1057
        %v1195 = vadd.f32 %v1105, %v1191
        %v1202 = vrot.slane %v1128, 1
        %v1203 = vrot.slane %v1129, 1
        %v1204 = vsel %vm712, %v1202, %v1203
        %v1205 = vrot.slane %v1130, 1
        %v1206 = vsel %vm712, %v1203, %v1205
        %v1207 = vrot.slane %v1131, 1
        %v1208 = vrot.slane %v1132, 1
        %v1209 = vsel %vm712, %v1207, %v1208
        %v1210 = vrot.slane %v1133, 1
        %v1211 = vsel %vm712, %v1208, %v1210
        %v1216 = vadd.f32 %v1192, %v1204
        %v1217 = vadd.f32 %v1193, %v1206
        %v1218 = vadd.f32 %v1194, %v1209
        %v1219 = vadd.f32 %v1195, %v1211
        %v1226 = vrot.slane %v1184, 1
        %v1227 = vrot.slane %v1185, 1
        %v1228 = vsel %vm712, %v1226, %v1227
        %v1229 = vrot.slane %v1186, 1
        %v1230 = vsel %vm712, %v1227, %v1229
        %v1231 = vrot.slane %v1187, 1
        %v1232 = vrot.slane %v1188, 1
        %v1233 = vsel %vm712, %v1231, %v1232
        %v1234 = vrot.slane %v1189, 1
        %v1235 = vsel %vm712, %v1232, %v1234
        %v1242 = vadd.f32 %v1156, %v1228
        %v1243 = vadd.f32 %v1157, %v1230
        %v1244 = vadd.f32 %v1158, %v1229
        %v1245 = vadd.f32 %v1159, %v1233
        %v1246 = vadd.f32 %v1160, %v1235
        %v1247 = vadd.f32 %v1161, %v1234
        %v1254 = vrot.slane %v1242, 2
        %v1255 = vrot.slane %v1243, 2
        %v1256 = vsel %vm765, %v1254, %v1255
        %v1257 = vrot.slane %v1244, 2
        %v1258 = vsel %vm765, %v1255, %v1257
        %v1259 = vrot.slane %v1245, 2
        %v1260 = vrot.slane %v1246, 2
        %v1261 = vsel %vm765, %v1259, %v1260
        %v1262 = vrot.slane %v1247, 2
        %v1263 = vsel %vm765, %v1260, %v1262
        %v1268 = vadd.f32 %v1216, %v1256
        %v1269 = vadd.f32 %v1217, %v1258
        %v1270 = vadd.f32 %v1218, %v1261
        %v1271 = vadd.f32 %v1219, %v1263
        %v1276 = vrot.slane %v1268, 4
        %v1277 = vrot.slane %v1269, 4
        %v1278 = vsel %vm597, %v1276, %v1277
        %v1279 = vrot.slane %v1270, 4
        %v1280 = vrot.slane %v1271, 4
        %v1281 = vsel %vm597, %v1279, %v1280
        %1282 = vrot.lane.b32.xlu0 %v1276, 4
        %v1283 = vpop.permute.xlu0 %1282
        %1284 = vrot.lane.b32.xlu0 %v1278, 4
        %v1285 = vpop.permute.xlu0 %1284
        %1286 = vrot.lane.b32.xlu0 %v1277, 4
        %v1287 = vpop.permute.xlu0 %1286
        %1288 = vrot.lane.b32.xlu0 %v1279, 4
        %v1289 = vpop.permute.xlu0 %1288
        %1290 = vrot.lane.b32.xlu0 %v1281, 4
        %v1291 = vpop.permute.xlu0 %1290
        %1292 = vrot.lane.b32.xlu0 %v1280, 4
        %v1293 = vpop.permute.xlu0 %1292
        %v1300 = vsub.f32 %v287, %v1283
        %v1301 = vsub.f32 %v288, %v1285
        %v1302 = vsub.f32 %v289, %v1287
        %v1303 = vsub.f32 %v290, %v1289
        %v1304 = vsub.f32 %v291, %v1291
        %v1305 = vsub.f32 %v292, %v1293
        %vm1306 = vcmask 130048
        %1307 = vst.msk [vmem:[%s261] sm:$0xff] %vm1306, %v780
        %1308 = vst.msk [vmem:[%s261 + $0x8] sm:$0xff] %vm1306, %v781
        %1309 = vst.msk [vmem:[%s261 + $0x10] sm:$0xff] %vm1306, %v782
        %1310 = vst.msk [vmem:[%s261 + $0x18] sm:$0xff] %vm1306, %v783
        %1317 = vrot.lane.b32.xlu0 %v1300, 124
        %v1318 = vpop.permute.xlu0 %1317
        %1319 = vrot.lane.b32.xlu0 %v1301, 124
        %v1320 = vpop.permute.xlu0 %1319
        %1321 = vrot.lane.b32.xlu0 %v1302, 124
        %v1322 = vpop.permute.xlu0 %1321
        %1323 = vrot.lane.b32.xlu0 %v1303, 124
        %v1324 = vpop.permute.xlu0 %1323
        %1325 = vrot.lane.b32.xlu0 %v1304, 124
        %v1326 = vpop.permute.xlu0 %1325
        %1327 = vrot.lane.b32.xlu0 %v1305, 124
        %v1328 = vpop.permute.xlu0 %1327
        %vm1335 = vcmask 130052
        %1336 = vst.msk [vmem:[%s268 - $0x4] sm:$0xf0] %vm1335, %v1318
        %1337 = vst.msk [vmem:[%s268 + $0x4] sm:$0xff] %vm1306, %v1320
        %vm1338 = vcmask 125952
        %1339 = vst.msk [vmem:[%s268 + $0xc] sm:$0xf] %vm1338, %v1322
        %1340 = vst.msk [vmem:[%s268 + $0xc] sm:$0xf0] %vm1335, %v1324
        %1341 = vst.msk [vmem:[%s268 + $0x14] sm:$0xff] %vm1306, %v1326
        %1342 = vst.msk [vmem:[%s268 + $0x1c] sm:$0xf] %vm1338, %v1328
        %v1343 = vrot.slane %v1300, 4
        %v1344 = vrot.slane %v1301, 4
        %v1345 = vsel %vm597, %v1343, %v1344
        %v1346 = vrot.slane %v1302, 4
        %v1347 = vsel %vm597, %v1344, %v1346
        %v1348 = vrot.slane %v1303, 4
        %v1349 = vrot.slane %v1304, 4
        %v1350 = vsel %vm597, %v1348, %v1349
        %v1351 = vrot.slane %v1305, 4
        %v1352 = vsel %vm597, %v1349, %v1351
        %1353 = vrot.lane.b32.xlu0 %v1345, 124
        %v1354 = vpop.permute.xlu0 %1353
        %1355 = vrot.lane.b32.xlu0 %v1347, 124
        %v1356 = vpop.permute.xlu0 %1355
        %1357 = vrot.lane.b32.xlu0 %v1350, 124
        %v1358 = vpop.permute.xlu0 %1357
        %1359 = vrot.lane.b32.xlu0 %v1352, 124
        %v1360 = vpop.permute.xlu0 %1359
        %v1365 = vadd.f32 %v780, %v1354
        %v1366 = vadd.f32 %v781, %v1356
        %v1367 = vadd.f32 %v782, %v1358
        %v1368 = vadd.f32 %v783, %v1360
        %v1369 = vmax.f32 %v1365, 0.0
        %v1370 = vmax.f32 %v1366, 0.0
        %v1371 = vmax.f32 %v1367, 0.0
        %v1372 = vmax.f32 %v1368, 0.0
        %v1373 = vmin.f32 %v1369, 1.0
        %v1374 = vmin.f32 %v1370, 1.0
        %v1375 = vmin.f32 %v1371, 1.0
        %v1376 = vmin.f32 %v1372, 1.0
        %1377 = vst.msk [vmem:[%s275] sm:$0xff] %vm1306, %v1373
        %1378 = vst.msk [vmem:[%s275 + $0x8] sm:$0xff] %vm1306, %v1374
        %1379 = vst.msk [vmem:[%s275 + $0x10] sm:$0xff] %vm1306, %v1375
        %1380 = vst.msk [vmem:[%s275 + $0x18] sm:$0xff] %vm1306, %v1376
        %s1381 = sand.u32 %s88, 1
        %s1382 = scalar_lea.sflag [#allocation4], %s1381
        %s1383 = sand.u32 %s88, 1
        %s1384 = smul.addr %s1383, 32
        %s1385 = scalar_lea.vmem [#allocation7], %s1384
        %s1386 = sand.u32 %s28, 1
        %s1387 = scalar_lea.sflag [#allocation9], %s1386
        %s1388 = sand.u32 %s114, 1
        %s1389 = smul.addr %s1388, 32
        %s1390 = scalar_lea.vmem [#allocation8], %s1389
        %s1391 = sand.u32 %s28, 1
        %s1392 = scalar_lea.sflag [#allocation9], %s1391
        %s1393 = sand.u32 %s140, 1
        %s1394 = smul.addr %s1393, 32
        %s1395 = scalar_lea.vmem [#allocation10], %s1394
        // Predicated region
        $region37: #{tpu_custom_call.1} parent=27 // pred_check
          %p1396 = pneg %p98
        $region38: #{tpu_custom_call.1} parent=27 // pred_check_branch
          %1398 = sbr.rel (%p1396) target = $region40
        $region39: #{tpu_custom_call.1} parent=27 // pred_region
          %s1399 = smul.u32 2, %s28
          %s1401 = ssub.s32 512, 512
          %1402 = vsyncadd %s1382, %s1401
          %s1403 = smul.addr %s1399, 2
          %s1404 = smul.addr %s1403, 128
          %s1405 = scalar_lea.hbm %s2, %s1404
          %s1406 = sshll.u32 %s1385, 4
          %s1407 = int_to_ptr.vmem [resolvable:$true] %s1406
          %1412 = dma.vmem_to_hbm [thread:$0]  %s1407, 512, %s1405, %s1382, 128, 128, 8
        $region40: #{tpu_custom_call.1} parent=27 // pred_fallthru
          _
        // Predicated region
        $region41: #{tpu_custom_call.1} parent=27 // pred_check
          %p1413 = pneg %p124
        $region42: #{tpu_custom_call.1} parent=27 // pred_check_branch
          %1415 = sbr.rel (%p1413) target = $region44
        $region43: #{tpu_custom_call.1} parent=27 // pred_region
          %s1416 = smul.u32 2, %s28
          %s1418 = ssub.s32 512, 512
          %1419 = vsyncadd %s1387, %s1418
          %s1420 = smul.addr %s1416, 2
          %s1421 = smul.addr %s1420, 128
          %s1422 = scalar_lea.hbm %s3, %s1421
          %s1423 = sshll.u32 %s1390, 4
          %s1424 = int_to_ptr.vmem [resolvable:$true] %s1423
          %1429 = dma.vmem_to_hbm [thread:$0]  %s1424, 512, %s1422, %s1387, 128, 128, 8
        $region44: #{tpu_custom_call.1} parent=27 // pred_fallthru
          _
        // Predicated region
        $region45: #{tpu_custom_call.1} parent=27 // pred_check
          %p1430 = pneg %p150
        $region46: #{tpu_custom_call.1} parent=27 // pred_check_branch
          %1432 = sbr.rel (%p1430) target = $region48
        $region47: #{tpu_custom_call.1} parent=27 // pred_region
          %s1433 = smul.u32 2, %s28
          %s1435 = ssub.s32 512, 512
          %1436 = vsyncadd %s1392, %s1435
          %s1437 = smul.addr %s1433, 2
          %s1438 = smul.addr %s1437, 128
          %s1439 = scalar_lea.hbm %s4, %s1438
          %s1440 = sshll.u32 %s1395, 4
          %s1441 = int_to_ptr.vmem [resolvable:$true] %s1440
          %1446 = dma.vmem_to_hbm [thread:$0]  %s1441, 512, %s1439, %s1392, 128, 128, 8
        $region48: #{tpu_custom_call.1} parent=27 // pred_fallthru
          _
      $region28: #{tpu_custom_call.1} parent=5 // pred_fallthru
        _
      %p1447 = scmp.le.s32.totalorder 2, %s23
      // Predicated region
      $region49: #{tpu_custom_call.1} parent=5 // pred_check
        %p1448 = pneg %p1447
      $region50: #{tpu_custom_call.1} parent=5 // pred_check_branch
        %1450 = sbr.rel (%p1448) target = $region52
      $region51: #{tpu_custom_call.1} parent=5 // pred_region
        %s1451 = ssub.s32 %s23, 2
        // Predicated region
        $region53: #{tpu_custom_call.1} parent=51 // pred_check
          %p1452 = pneg %p104
        $region54: #{tpu_custom_call.1} parent=51 // pred_check_branch
          %1454 = sbr.rel (%p1452) target = $region56
        $region55: #{tpu_custom_call.1} parent=51 // pred_region
          %s1455 = sand.u32 %s89, 1
          %s1456 = scalar_lea.sflag [#allocation4], %s1455
          %s1457 = sand.u32 %s89, 1
          %s1458 = smul.addr %s1457, 32
          %s1459 = scalar_lea.vmem [#allocation7], %s1458
          %1460 = dma.done %s1456, 512
        $region56: #{tpu_custom_call.1} parent=51 // pred_fallthru
          _
        // Predicated region
        $region57: #{tpu_custom_call.1} parent=51 // pred_check
          %p1461 = pneg %p130
        $region58: #{tpu_custom_call.1} parent=51 // pred_check_branch
          %1463 = sbr.rel (%p1461) target = $region60
        $region59: #{tpu_custom_call.1} parent=51 // pred_region
          %s1464 = sand.u32 %s29, 1
          %s1465 = scalar_lea.sflag [#allocation9], %s1464
          %s1466 = sand.u32 %s115, 1
          %s1467 = smul.addr %s1466, 32
          %s1468 = scalar_lea.vmem [#allocation8], %s1467
          %1469 = dma.done %s1465, 512
        $region60: #{tpu_custom_call.1} parent=51 // pred_fallthru
          _
        // Predicated region
        $region61: #{tpu_custom_call.1} parent=51 // pred_check
          %p1470 = pneg %p156
        $region62: #{tpu_custom_call.1} parent=51 // pred_check_branch
          %1472 = sbr.rel (%p1470) target = $region64
        $region63: #{tpu_custom_call.1} parent=51 // pred_region
          %s1473 = sand.u32 %s29, 1
          %s1474 = scalar_lea.sflag [#allocation9], %s1473
          %s1475 = sand.u32 %s141, 1
          %s1476 = smul.addr %s1475, 32
          %s1477 = scalar_lea.vmem [#allocation10], %s1476
          %1478 = dma.done %s1474, 512
        $region64: #{tpu_custom_call.1} parent=51 // pred_fallthru
          _
      $region52: #{tpu_custom_call.1} parent=5 // pred_fallthru
        _
    $region6: #{tpu_custom_call.1} parent=1 // loop_footer
      %s27 = sadd.s32 1, %s23
    $region7: #{tpu_custom_call.1} parent=1 // loop_footer_branch
      %22 = sbr.rel target = $region3
    $region8: #{tpu_custom_call.1} parent=1 // loop_exit
      _
    %1479 = vsyncpa [#allocation3], 1
    %s1480 = scalar_lea.sflag [#allocation3], 1
    %1481 = vsyncpa %s1480, 1
    %1482 = vsyncpa [#allocation6], 1
    %s1483 = scalar_lea.sflag [#allocation6], 1
    %1484 = vsyncpa %s1483, 1
    %1485 = vsyncpa [#allocation4], 1
    %s1486 = scalar_lea.sflag [#allocation4], 1
    %1487 = vsyncpa %s1486, 1
    %1488 = vsyncpa [#allocation9], 1
    %s1489 = scalar_lea.sflag [#allocation9], 1
    %1490 = vsyncpa %s1489, 1

</llo_original>
